<compile_context>
chip_gen: v7x
topology: tpu7x:2x2x1
jax: 0.10.0
libtpu: 0.0.40
codegen_flags: <defaults>
</compile_context>

<pallas_src>
import jax
import jax.numpy as jnp
from jax.experimental import pallas as pl
from jax.experimental.pallas import tpu as pltpu

# ---------------- static model dimensions ----------------
VOCAB, EMB = 21, 24
C_IN, C1, C2 = 18, 128, 64
K = 3
L0 = EMB                 # 24  (Conv1d "length" axis = embedding dim)
L1 = L0 - K + 1          # 22
L1P = L1 - K + 1         # 20
L2 = L1P - K + 1         # 18
L2P = L2 - K + 1         # 16
STRIPE = 32              # per-sample row stripe (multiple of 8 sublanes, >= L0)


def _shift_rows(x, k):
    """out[r, :] = x[r + k, :]; bottom k rows are zero (only feed unused pad rows)."""
    if k == 0:
        return x
    pad = jnp.zeros((k, x.shape[1]), x.dtype)
    return jnp.concatenate([x[k:, :], pad], axis=0)


def cnn_kernel(a0_ref, w1_ref, b1_ref, w2_ref, b2_ref,
               f1_ref, fc1b_ref, fc2w_ref, fc2b_ref, out_ref):
    a0 = a0_ref[...]                                              # (R, 18) f32

    # ---- conv1 (im2col, single MXU matmul): (R, 54) @ (54, 128) ----
    x1 = jnp.concatenate([_shift_rows(a0, k) for k in range(K)], axis=1)
    c1 = jnp.dot(x1.astype(jnp.bfloat16), w1_ref[...],
                 preferred_element_type=jnp.float32) + b1_ref[...]    # (R, 128)

    # dropout1: identity (eval mode)
    # ---- maxpool1 (k=3, s=1) along the length (sublane) axis ----
    m1 = jnp.maximum(jnp.maximum(c1, _shift_rows(c1, 1)), _shift_rows(c1, 2))

    # ---- conv2 (im2col, single MXU matmul): (R, 384) @ (384, 64) ----
    x2 = jnp.concatenate([_shift_rows(m1, k) for k in range(K)], axis=1)
    c2 = jnp.dot(x2.astype(jnp.bfloat16), w2_ref[...],
                 preferred_element_type=jnp.float32) + b2_ref[...]    # (R, 64)

    # dropout2: identity (eval mode)
    # ---- maxpool2 (k=3, s=1) ----
    m2 = jnp.maximum(jnp.maximum(c2, _shift_rows(c2, 1)), _shift_rows(c2, 2))

    # ---- fc1 as one batched matmul: (BT, R) @ (R, 64); F holds the fc1 weights
    #      at the 16 valid rows of each 32-row stripe (all other rows hit zeros) ----
    y1 = jnp.tanh(jnp.dot(f1_ref[...], m2,
                          preferred_element_type=jnp.float32) + fc1b_ref[...])  # (BT, 64)

    # ---- fc2 as one matmul: (BT, 64) @ (64, 1) ----
    y2 = jnp.tanh(jnp.dot(y1, fc2w_ref[...],
                          preferred_element_type=jnp.float32) + fc2b_ref[...])  # (BT, 1)

    out_ref[...] = y2.reshape(out_ref.shape)


def cnn_forward(x_idx, params, *, b_tile=None):
    """x_idx: (B, 18) int32 ids.  Returns (B,) float32 (torch .squeeze())."""
    B = x_idx.shape[0]
    if b_tile is None:
        b_tile = B                       # one tile for small batches
    assert B % b_tile == 0, "batch must be divisible by the batch tile"
    num_tiles = B // b_tile
    rows_per_tile = b_tile * STRIPE

    # ---- glue: embedding gather + layout (channels -> lanes, padded 32-row stripes) ----
    emb = params["emb"][x_idx].astype(jnp.float32)                # (B, 18, 24)
    e_t = jnp.transpose(emb, (0, 2, 1))                           # (B, 24, 18): [b, l, c]
    a0 = jnp.pad(e_t, ((0, 0), (0, STRIPE - L0), (0, 0)))         # (B, 32, 18)
    a0 = a0.reshape(B * STRIPE, C_IN)                             # (B*32, 18)

    # ---- glue: parameter packing ----
    # im2col weights: row index = k*C_in + c, so W_mat[k*Cin + c, o] = W[o, c, k]
    w1_mat = jnp.transpose(params["w1"], (2, 1, 0)).reshape(K * C_IN, C1).astype(jnp.bfloat16)
    w2_mat = jnp.transpose(params["w2"], (2, 1, 0)).reshape(K * C1, C2).astype(jnp.bfloat16)
    b1_row = params["b1"].reshape(1, C1).astype(jnp.float32)
    b2_row = params["b2"].reshape(1, C2).astype(jnp.float32)

    # F: (b_tile, b_tile*32) with F[b, b*32 + l] = fc1w[l] for l < 16, else 0.
    fc1w_pad = jnp.pad(params["fc1w"].reshape(1, L2P).astype(jnp.float32),
                       ((0, 0), (0, STRIPE - L2P)))               # (1, 32)
    f1 = jnp.kron(jnp.eye(b_tile, dtype=jnp.float32), fc1w_pad)   # (bt, bt*32)
    fc1b = params["fc1b"].reshape(1, 1).astype(jnp.float32)
    fc2w_col = params["fc2w"].reshape(C2, 1).astype(jnp.float32)
    fc2b = params["fc2b"].reshape(1, 1).astype(jnp.float32)

    out = pl.pallas_call(
        cnn_kernel,
        out_shape=jax.ShapeDtypeStruct((num_tiles, b_tile, 1), jnp.float32),
        grid=(num_tiles,),
        in_specs=[
            pl.BlockSpec((rows_per_tile, C_IN), lambda i: (i, 0)),       # A0 batch tile
            pl.BlockSpec((K * C_IN, C1),        lambda i: (0, 0)),       # conv1 im2col weights
            pl.BlockSpec((1, C1),               lambda i: (0, 0)),       # conv1 bias
            pl.BlockSpec((K * C1, C2),          lambda i: (0, 0)),       # conv2 im2col weights
            pl.BlockSpec((1, C2),               lambda i: (0, 0)),       # conv2 bias
            pl.BlockSpec((b_tile, rows_per_tile), lambda i: (0, 0)),     # fc1 selector+weights
            pl.BlockSpec((1, 1),                lambda i: (0, 0)),       # fc1 bias
            pl.BlockSpec((C2, 1),               lambda i: (0, 0)),       # fc2 weights
            pl.BlockSpec((1, 1),                lambda i: (0, 0)),       # fc2 bias
        ],
        out_specs=pl.BlockSpec((1, b_tile, 1), lambda i: (i, 0, 0)),
        compiler_params=pltpu.CompilerParams(
            dimension_semantics=("parallel",)),      # batch-tiled grid: 2x on v7x megacore
    )(a0, w1_mat, b1_row, w2_mat, b2_row, f1, fc1b, fc2w_col, fc2b)

    return out.reshape(B)                                          # torch .squeeze()


# ---------------- reference (mirrors kernel precision: bf16 conv inputs, f32 accum) ----------------
def cnn_reference(x_idx, params):
    emb = params["emb"][x_idx].astype(jnp.float32)                 # (B, 18, 24)

    def conv1d(x, w, b):                                           # x:(B,C,L) w:(O,C,K)
        Lout = x.shape[2] - w.shape[2] + 1
        xb, wb = x.astype(jnp.bfloat16), w.astype(jnp.bfloat16)
        out = jnp.zeros((x.shape[0], w.shape[0], Lout), jnp.float32)
        for k in range(w.shape[2]):
            out = out + jnp.einsum('bcl,oc->bol', xb[:, :, k:k + Lout], wb[:, :, k],
                                   preferred_element_type=jnp.float32)
        return out + b[None, :, None]

    def maxpool(x):
        L = x.shape[2] - 2
        return jnp.maximum(jnp.maximum(x[:, :, 0:L], x[:, :, 1:1 + L]),
                           x[:, :, 2:2 + L])

    h = maxpool(conv1d(emb, params["w1"], params["b1"]))
    h = maxpool(conv1d(h, params["w2"], params["b2"]))
    y1 = jnp.tanh(jnp.einsum('bcl,l->bc', h, params["fc1w"][0]) + params["fc1b"][0])
    y2 = jnp.tanh(jnp.einsum('bc,c->b', y1, params["fc2w"][0]) + params["fc2b"][0])
    return y2


# ---------------- deterministic parameter init ----------------
def init_params(key):
    ks = jax.random.split(key, 9)

    def unif(k, shape, bound):
        return jax.random.uniform(k, shape, jnp.float32, -bound, bound)

    return {
        "emb": jax.random.normal(ks[0], (VOCAB, EMB), jnp.float32),
        "w1": unif(ks[1], (C1, C_IN, K), 1.0 / (C_IN * K) ** 0.5),
        "b1": unif(ks[2], (C1,), 1.0 / (C_IN * K) ** 0.5),
        "w2": unif(ks[3], (C2, C1, K), 1.0 / (C1 * K) ** 0.5),
        "b2": unif(ks[4], (C2,), 1.0 / (C1 * K) ** 0.5),
        "fc1w": unif(ks[5], (1, L2P), 1.0 / L2P ** 0.5),
        "fc1b": unif(ks[6], (1,), 1.0 / L2P ** 0.5),
        "fc2w": unif(ks[7], (1, C2), 1.0 / C2 ** 0.5),
        "fc2b": unif(ks[8], (1,), 1.0 / C2 ** 0.5),
    }


if __name__ == "__main__":
    root = jax.random.PRNGKey(0)
    k_params, k_x = jax.random.split(root)

    params = init_params(k_params)
    B = 2
    x = jax.random.randint(k_x, (B, C_IN), 0, VOCAB, dtype=jnp.int32)  # (2, 18)

    out = jax.jit(cnn_forward)(x, params)
    out = jax.block_until_ready(out)

    ref = cnn_reference(x, params)
    assert out.shape == (B,), out.shape
    assert jnp.allclose(out, ref, atol=5e-3, rtol=5e-3), (out, ref)

    print("KERNEL_OK")
</pallas_src>

<mosaic_0001>
module attributes {stable_mosaic.version = 11 : i64} {
  func.func @cnn_kernel(%arg0: i32, %arg1: memref<64x18xf32, #tpu.memory_space<vmem>>, %arg2: memref<54x128xbf16, #tpu.memory_space<vmem>>, %arg3: memref<1x128xf32, #tpu.memory_space<vmem>>, %arg4: memref<384x64xbf16, #tpu.memory_space<vmem>>, %arg5: memref<1x64xf32, #tpu.memory_space<vmem>>, %arg6: memref<2x64xf32, #tpu.memory_space<vmem>>, %arg7: memref<1x1xf32, #tpu.memory_space<vmem>>, %arg8: memref<64x1xf32, #tpu.memory_space<vmem>>, %arg9: memref<1x1xf32, #tpu.memory_space<vmem>>, %arg10: memref<1x2x1xf32, #tpu.memory_space<vmem>>) attributes {dimension_semantics = [#tpu.dimension_semantics<parallel>], iteration_bounds = array<i64: 1>, scalar_prefetch = 0 : i64, scratch_operands = 0 : i64, tpu.core_type = #tpu.core_type<tc>, window_params = [{transform_indices = @transform_0, window_bounds = array<i64: 64, 18>}, {pipeline_mode = #tpu.pipeline_mode<synchronous>, transform_indices = @transform_1, window_bounds = array<i64: 54, 128>}, {pipeline_mode = #tpu.pipeline_mode<synchronous>, transform_indices = @transform_2, window_bounds = array<i64: 1, 128>}, {pipeline_mode = #tpu.pipeline_mode<synchronous>, transform_indices = @transform_3, window_bounds = array<i64: 384, 64>}, {pipeline_mode = #tpu.pipeline_mode<synchronous>, transform_indices = @transform_4, window_bounds = array<i64: 1, 64>}, {pipeline_mode = #tpu.pipeline_mode<synchronous>, transform_indices = @transform_5, window_bounds = array<i64: 2, 64>}, {pipeline_mode = #tpu.pipeline_mode<synchronous>, transform_indices = @transform_6, window_bounds = array<i64: 1, 1>}, {pipeline_mode = #tpu.pipeline_mode<synchronous>, transform_indices = @transform_7, window_bounds = array<i64: 64, 1>}, {pipeline_mode = #tpu.pipeline_mode<synchronous>, transform_indices = @transform_8, window_bounds = array<i64: 1, 1>}, {transform_indices = @transform_9, window_bounds = array<i64: 1, 2, 1>}]} {
    %c0 = arith.constant 0 : index
    %c0_0 = arith.constant 0 : index
    %0 = vector.load %arg1[%c0, %c0_0] : memref<64x18xf32, #tpu.memory_space<vmem>>, vector<64x18xf32>
    %cst = arith.constant 0.000000e+00 : f32
    %1 = vector.broadcast %cst : f32 to vector<1x18xf32>
    %2 = vector.extract_strided_slice %0 {offsets = [1, 0], sizes = [63, 18], strides = [1, 1]} : vector<64x18xf32> to vector<63x18xf32>
    %3 = tpu.concatenate %2, %1 in 0 : vector<63x18xf32>, vector<1x18xf32> -> vector<64x18xf32>
    %cst_1 = arith.constant 0.000000e+00 : f32
    %4 = vector.broadcast %cst_1 : f32 to vector<2x18xf32>
    %5 = vector.extract_strided_slice %0 {offsets = [2, 0], sizes = [62, 18], strides = [1, 1]} : vector<64x18xf32> to vector<62x18xf32>
    %6 = tpu.concatenate %5, %4 in 0 : vector<62x18xf32>, vector<2x18xf32> -> vector<64x18xf32>
    %7 = tpu.concatenate %0, %3, %6 in 1 : vector<64x18xf32>, vector<64x18xf32>, vector<64x18xf32> -> vector<64x54xf32>
    %8 = arith.truncf %7 : vector<64x54xf32> to vector<64x54xbf16>
    %c0_2 = arith.constant 0 : index
    %c0_3 = arith.constant 0 : index
    %9 = vector.load %arg2[%c0_2, %c0_3] : memref<54x128xbf16, #tpu.memory_space<vmem>>, vector<54x128xbf16>
    %cst_4 = arith.constant dense<0.000000e+00> : vector<64x128xf32>
    %10 = tpu.matmul %8, %9, %cst_4 {dimension_numbers = #tpu.dot_dimension_numbers<[1], [0], [0], [1], [0, 0, 1, 1], [], []>} : vector<64x54xbf16>, vector<54x128xbf16>, vector<64x128xf32> -> vector<64x128xf32>
    %c0_5 = arith.constant 0 : index
    %c0_6 = arith.constant 0 : index
    %11 = vector.load %arg3[%c0_5, %c0_6] : memref<1x128xf32, #tpu.memory_space<vmem>>, vector<1x128xf32>
    %12 = vector.broadcast %11 : vector<1x128xf32> to vector<64x128xf32>
    %13 = arith.addf %10, %12 : vector<64x128xf32>
    %cst_7 = arith.constant 0.000000e+00 : f32
    %14 = vector.broadcast %cst_7 : f32 to vector<1x128xf32>
    %15 = vector.extract_strided_slice %13 {offsets = [1, 0], sizes = [63, 128], strides = [1, 1]} : vector<64x128xf32> to vector<63x128xf32>
    %16 = tpu.concatenate %15, %14 in 0 : vector<63x128xf32>, vector<1x128xf32> -> vector<64x128xf32>
    %17 = arith.maximumf %13, %16 : vector<64x128xf32>
    %cst_8 = arith.constant 0.000000e+00 : f32
    %18 = vector.broadcast %cst_8 : f32 to vector<2x128xf32>
    %19 = vector.extract_strided_slice %13 {offsets = [2, 0], sizes = [62, 128], strides = [1, 1]} : vector<64x128xf32> to vector<62x128xf32>
    %20 = tpu.concatenate %19, %18 in 0 : vector<62x128xf32>, vector<2x128xf32> -> vector<64x128xf32>
    %21 = arith.maximumf %17, %20 : vector<64x128xf32>
    %cst_9 = arith.constant 0.000000e+00 : f32
    %22 = vector.broadcast %cst_9 : f32 to vector<1x128xf32>
    %23 = vector.extract_strided_slice %21 {offsets = [1, 0], sizes = [63, 128], strides = [1, 1]} : vector<64x128xf32> to vector<63x128xf32>
    %24 = tpu.concatenate %23, %22 in 0 : vector<63x128xf32>, vector<1x128xf32> -> vector<64x128xf32>
    %cst_10 = arith.constant 0.000000e+00 : f32
    %25 = vector.broadcast %cst_10 : f32 to vector<2x128xf32>
    %26 = vector.extract_strided_slice %21 {offsets = [2, 0], sizes = [62, 128], strides = [1, 1]} : vector<64x128xf32> to vector<62x128xf32>
    %27 = tpu.concatenate %26, %25 in 0 : vector<62x128xf32>, vector<2x128xf32> -> vector<64x128xf32>
    %28 = tpu.concatenate %21, %24, %27 in 1 : vector<64x128xf32>, vector<64x128xf32>, vector<64x128xf32> -> vector<64x384xf32>
    %29 = arith.truncf %28 : vector<64x384xf32> to vector<64x384xbf16>
    %c0_11 = arith.constant 0 : index
    %c0_12 = arith.constant 0 : index
    %30 = vector.load %arg4[%c0_11, %c0_12] : memref<384x64xbf16, #tpu.memory_space<vmem>>, vector<384x64xbf16>
    %cst_13 = arith.constant dense<0.000000e+00> : vector<64x64xf32>
    %31 = tpu.matmul %29, %30, %cst_13 {dimension_numbers = #tpu.dot_dimension_numbers<[1], [0], [0], [1], [0, 0, 1, 1], [], []>} : vector<64x384xbf16>, vector<384x64xbf16>, vector<64x64xf32> -> vector<64x64xf32>
    %c0_14 = arith.constant 0 : index
    %c0_15 = arith.constant 0 : index
    %32 = vector.load %arg5[%c0_14, %c0_15] : memref<1x64xf32, #tpu.memory_space<vmem>>, vector<1x64xf32>
    %33 = vector.broadcast %32 : vector<1x64xf32> to vector<64x64xf32>
    %34 = arith.addf %31, %33 : vector<64x64xf32>
    %cst_16 = arith.constant 0.000000e+00 : f32
    %35 = vector.broadcast %cst_16 : f32 to vector<1x64xf32>
    %36 = vector.extract_strided_slice %34 {offsets = [1, 0], sizes = [63, 64], strides = [1, 1]} : vector<64x64xf32> to vector<63x64xf32>
    %37 = tpu.concatenate %36, %35 in 0 : vector<63x64xf32>, vector<1x64xf32> -> vector<64x64xf32>
    %38 = arith.maximumf %34, %37 : vector<64x64xf32>
    %cst_17 = arith.constant 0.000000e+00 : f32
    %39 = vector.broadcast %cst_17 : f32 to vector<2x64xf32>
    %40 = vector.extract_strided_slice %34 {offsets = [2, 0], sizes = [62, 64], strides = [1, 1]} : vector<64x64xf32> to vector<62x64xf32>
    %41 = tpu.concatenate %40, %39 in 0 : vector<62x64xf32>, vector<2x64xf32> -> vector<64x64xf32>
    %42 = arith.maximumf %38, %41 : vector<64x64xf32>
    %c0_18 = arith.constant 0 : index
    %c0_19 = arith.constant 0 : index
    %43 = vector.load %arg6[%c0_18, %c0_19] : memref<2x64xf32, #tpu.memory_space<vmem>>, vector<2x64xf32>
    %cst_20 = arith.constant dense<0.000000e+00> : vector<2x64xf32>
    %44 = tpu.matmul %43, %42, %cst_20 {dimension_numbers = #tpu.dot_dimension_numbers<[1], [0], [0], [1], [0, 0, 1, 1], [], []>} : vector<2x64xf32>, vector<64x64xf32>, vector<2x64xf32> -> vector<2x64xf32>
    %c0_21 = arith.constant 0 : index
    %c0_22 = arith.constant 0 : index
    %45 = vector.load %arg7[%c0_21, %c0_22] : memref<1x1xf32, #tpu.memory_space<vmem>>, vector<1x1xf32>
    %46 = vector.broadcast %45 : vector<1x1xf32> to vector<2x64xf32>
    %47 = arith.addf %44, %46 : vector<2x64xf32>
    %48 = math.tanh %47 : vector<2x64xf32>
    %c0_23 = arith.constant 0 : index
    %c0_24 = arith.constant 0 : index
    %49 = vector.load %arg8[%c0_23, %c0_24] : memref<64x1xf32, #tpu.memory_space<vmem>>, vector<64x1xf32>
    %cst_25 = arith.constant dense<0.000000e+00> : vector<2x1xf32>
    %50 = tpu.matmul %48, %49, %cst_25 {dimension_numbers = #tpu.dot_dimension_numbers<[1], [0], [0], [1], [0, 0, 1, 1], [], []>} : vector<2x64xf32>, vector<64x1xf32>, vector<2x1xf32> -> vector<2x1xf32>
    %c0_26 = arith.constant 0 : index
    %c0_27 = arith.constant 0 : index
    %51 = vector.load %arg9[%c0_26, %c0_27] : memref<1x1xf32, #tpu.memory_space<vmem>>, vector<1x1xf32>
    %52 = vector.broadcast %51 : vector<1x1xf32> to vector<2x1xf32>
    %53 = arith.addf %50, %52 : vector<2x1xf32>
    %54 = math.tanh %53 : vector<2x1xf32>
    %55 = vector.shape_cast %54 : vector<2x1xf32> to vector<1x2x1xf32>
    %c0_28 = arith.constant 0 : index
    %c0_29 = arith.constant 0 : index
    %c0_30 = arith.constant 0 : index
    %56 = vector.load %arg10[%c0_28, %c0_29, %c0_30] : memref<1x2x1xf32, #tpu.memory_space<vmem>>, vector<1x2x1xf32>
    tpu.vector_store %arg10[%c0_28, %c0_29, %c0_30], %55 {strides = array<i32>} : memref<1x2x1xf32, #tpu.memory_space<vmem>>, vector<1x2x1xf32>,
    return
  }
  func.func @transform_0(%arg0: i32) -> (i32, i32) {
    %c0_i32 = arith.constant 0 : i32
    %c0_i32_0 = arith.constant 0 : i32
    return %arg0, %c0_i32 : i32, i32
  }
  func.func @transform_1(%arg0: i32) -> (i32, i32) {
    %c0_i32 = arith.constant 0 : i32
    %c0_i32_0 = arith.constant 0 : i32
    %c0_i32_1 = arith.constant 0 : i32
    return %c0_i32, %c0_i32_0 : i32, i32
  }
  func.func @transform_2(%arg0: i32) -> (i32, i32) {
    %c0_i32 = arith.constant 0 : i32
    %c0_i32_0 = arith.constant 0 : i32
    %c0_i32_1 = arith.constant 0 : i32
    return %c0_i32, %c0_i32_0 : i32, i32
  }
  func.func @transform_3(%arg0: i32) -> (i32, i32) {
    %c0_i32 = arith.constant 0 : i32
    %c0_i32_0 = arith.constant 0 : i32
    %c0_i32_1 = arith.constant 0 : i32
    return %c0_i32, %c0_i32_0 : i32, i32
  }
  func.func @transform_4(%arg0: i32) -> (i32, i32) {
    %c0_i32 = arith.constant 0 : i32
    %c0_i32_0 = arith.constant 0 : i32
    %c0_i32_1 = arith.constant 0 : i32
    return %c0_i32, %c0_i32_0 : i32, i32
  }
  func.func @transform_5(%arg0: i32) -> (i32, i32) {
    %c0_i32 = arith.constant 0 : i32
    %c0_i32_0 = arith.constant 0 : i32
    %c0_i32_1 = arith.constant 0 : i32
    return %c0_i32, %c0_i32_0 : i32, i32
  }
  func.func @transform_6(%arg0: i32) -> (i32, i32) {
    %c0_i32 = arith.constant 0 : i32
    %c0_i32_0 = arith.constant 0 : i32
    %c0_i32_1 = arith.constant 0 : i32
    return %c0_i32, %c0_i32_0 : i32, i32
  }
  func.func @transform_7(%arg0: i32) -> (i32, i32) {
    %c0_i32 = arith.constant 0 : i32
    %c0_i32_0 = arith.constant 0 : i32
    %c0_i32_1 = arith.constant 0 : i32
    return %c0_i32, %c0_i32_0 : i32, i32
  }
  func.func @transform_8(%arg0: i32) -> (i32, i32) {
    %c0_i32 = arith.constant 0 : i32
    %c0_i32_0 = arith.constant 0 : i32
    %c0_i32_1 = arith.constant 0 : i32
    return %c0_i32, %c0_i32_0 : i32, i32
  }
  func.func @transform_9(%arg0: i32) -> (i32, i32, i32) {
    %c0_i32 = arith.constant 0 : i32
    %c0_i32_0 = arith.constant 0 : i32
    %c0_i32_1 = arith.constant 0 : i32
    return %arg0, %c0_i32, %c0_i32_0 : i32, i32, i32
  }
}

</mosaic_0001>

<llo_original>
// kernel: cnn_forward.1
$region0: #{cnn_forward.1}
  #allocation0 [shape = 'u32[]', space=smem, size = 0x4, offset = 0x4, fixed_abs, tag = 'smem constant byte address 0x4 - core index']
  #allocation1 [shape = 'u32[144,128]{1,0:T(1,128)}', space=vmem, size = 0x12000, scoped, tag = 'internal scratch']
  #allocation2 [shape = 'f32[1,1]{1,0:T(1,128)S(1)}', space=vmem, size = 0x200, scoped, tag = 'scoped memory for cnn_forward.1']
  #allocation3 [shape = 'f32[1,1]{1,0:T(1,128)S(1)}', space=vmem, size = 0x200, scoped, tag = 'scoped memory for cnn_forward.1']
  %s0 = inlined_call_operand.vmem [shape: f32[64,18], index: 0, kind: input, shape index: {}]
  %s1 = inlined_call_operand.vmem [shape: bf16[54,128], index: 1, kind: input, shape index: {}]
  %s2 = inlined_call_operand.vmem [shape: f32[1,128], index: 2, kind: input, shape index: {}]
  %s3 = inlined_call_operand.vmem [shape: bf16[384,64], index: 3, kind: input, shape index: {}]
  %s4 = inlined_call_operand.vmem [shape: f32[1,64], index: 4, kind: input, shape index: {}]
  %s5 = inlined_call_operand.vmem [shape: f32[2,64], index: 5, kind: input, shape index: {}]
  %s6 = inlined_call_operand.<no memory space> [shape: f32[1,1], index: 6, kind: input, shape index: {}]
  %s7 = inlined_call_operand.vmem [shape: f32[64,1], index: 7, kind: input, shape index: {}]
  %s8 = inlined_call_operand.<no memory space> [shape: f32[1,1], index: 8, kind: input, shape index: {}]
  %s9 = inlined_call_operand.vmem [shape: f32[1,2,1], index: 9, kind: output, shape index: {}]
  %s10 = sld [smem:[#allocation0]]
  $region46: #{cnn_forward.1} parent=0
    _
  %s12 = ssub.s32 1, %s10
  %s13 = scalar_select 0, %s12, %s10
  %v14 = vstv %s6
  %15 = vst [vmem:[#allocation2] sm:$0x1] %v14
  %v16 = vstv %s8
  %17 = vst [vmem:[#allocation3] sm:$0x1] %v16
  // Predicated region
  $region2: #{cnn_forward.1} parent=0 // pred_check
    _
  $region3: #{cnn_forward.1} parent=0 // pred_check_branch
    %19 = sbr.rel (0) target = $region5
  $region4: #{cnn_forward.1} parent=0 // pred_region
    _
  $region5: #{cnn_forward.1} parent=0 // pred_fallthru
    _
  // Predicated region
  $region6: #{cnn_forward.1} parent=0 // pred_check
    _
  $region7: #{cnn_forward.1} parent=0 // pred_check_branch
    %21 = sbr.rel (0) target = $region9
  $region8: #{cnn_forward.1} parent=0 // pred_region
    _
  $region9: #{cnn_forward.1} parent=0 // pred_fallthru
    _
  // Predicated region
  $region10: #{cnn_forward.1} parent=0 // pred_check
    _
  $region11: #{cnn_forward.1} parent=0 // pred_check_branch
    %23 = sbr.rel (0) target = $region13
  $region12: #{cnn_forward.1} parent=0 // pred_region
    _
  $region13: #{cnn_forward.1} parent=0 // pred_fallthru
    _
  // Predicated region
  $region14: #{cnn_forward.1} parent=0 // pred_check
    _
  $region15: #{cnn_forward.1} parent=0 // pred_check_branch
    %25 = sbr.rel (0) target = $region17
  $region16: #{cnn_forward.1} parent=0 // pred_region
    _
  $region17: #{cnn_forward.1} parent=0 // pred_fallthru
    _
  // Predicated region
  $region18: #{cnn_forward.1} parent=0 // pred_check
    _
  $region19: #{cnn_forward.1} parent=0 // pred_check_branch
    %27 = sbr.rel (0) target = $region21
  $region20: #{cnn_forward.1} parent=0 // pred_region
    _
  $region21: #{cnn_forward.1} parent=0 // pred_fallthru
    _
  // Predicated region
  $region22: #{cnn_forward.1} parent=0 // pred_check
    _
  $region23: #{cnn_forward.1} parent=0 // pred_check_branch
    %29 = sbr.rel (0) target = $region25
  $region24: #{cnn_forward.1} parent=0 // pred_region
    _
  $region25: #{cnn_forward.1} parent=0 // pred_fallthru
    _
  // Predicated region
  $region26: #{cnn_forward.1} parent=0 // pred_check
    _
  $region27: #{cnn_forward.1} parent=0 // pred_check_branch
    %31 = sbr.rel (0) target = $region29
  $region28: #{cnn_forward.1} parent=0 // pred_region
    _
  $region29: #{cnn_forward.1} parent=0 // pred_fallthru
    _
  // Predicated region
  $region30: #{cnn_forward.1} parent=0 // pred_check
    _
  $region31: #{cnn_forward.1} parent=0 // pred_check_branch
    %33 = sbr.rel (0) target = $region33
  $region32: #{cnn_forward.1} parent=0 // pred_region
    _
  $region33: #{cnn_forward.1} parent=0 // pred_fallthru
    _
  // Predicated region
  $region34: #{cnn_forward.1} parent=0 // pred_check
    _
  $region35: #{cnn_forward.1} parent=0 // pred_check_branch
    %35 = sbr.rel (0) target = $region37
  $region36: #{cnn_forward.1} parent=0 // pred_region
    _
  $region37: #{cnn_forward.1} parent=0 // pred_fallthru
    _
  %v37 = vld [vmem:[%s0] sm:$0xff]
  %v38 = vld [vmem:[%s0 + $0x8] sm:$0xff]
  %v39 = vld [vmem:[%s0 + $0x10] sm:$0xff]
  %v40 = vld [vmem:[%s0 + $0x18] sm:$0xff]
  %v41 = vld [vmem:[%s0 + $0x20] sm:$0xff]
  %v42 = vld [vmem:[%s0 + $0x28] sm:$0xff]
  %v43 = vld [vmem:[%s0 + $0x30] sm:$0xff]
  %v44 = vld [vmem:[%s0 + $0x38] sm:$0xff]
  %vm53 = vcmask 1046528
  %v54 = vrot.slane %v37, 1
  %v55 = vrot.slane %v38, 1
  %v56 = vsel %vm53, %v54, %v55
  %v57 = vrot.slane %v39, 1
  %v58 = vsel %vm53, %v55, %v57
  %v59 = vrot.slane %v40, 1
  %v60 = vsel %vm53, %v57, %v59
  %v61 = vrot.slane %v41, 1
  %v62 = vsel %vm53, %v59, %v61
  %v63 = vrot.slane %v42, 1
  %v64 = vsel %vm53, %v61, %v63
  %v65 = vrot.slane %v43, 1
  %v66 = vsel %vm53, %v63, %v65
  %v67 = vrot.slane %v44, 1
  %v68 = vsel %vm53, %v65, %v67
  %v70 = vsel %vm53, %v67, 0.0
  %vm71 = vcmask 1045504
  %v72 = vrot.slane %v37, 2
  %v73 = vrot.slane %v38, 2
  %v74 = vsel %vm71, %v72, %v73
  %v75 = vrot.slane %v39, 2
  %v76 = vsel %vm71, %v73, %v75
  %v77 = vrot.slane %v40, 2
  %v78 = vsel %vm71, %v75, %v77
  %v79 = vrot.slane %v41, 2
  %v80 = vsel %vm71, %v77, %v79
  %v81 = vrot.slane %v42, 2
  %v82 = vsel %vm71, %v79, %v81
  %v83 = vrot.slane %v43, 2
  %v84 = vsel %vm71, %v81, %v83
  %v85 = vrot.slane %v44, 2
  %v86 = vsel %vm71, %v83, %v85
  %v88 = vsel %vm71, %v85, 0.0
  %90 = vrot.lane.b32.xlu0 %v56, 18
  %v91 = vpop.permute.xlu0 %90
  %92 = vrot.lane.b32.xlu0 %v58, 18
  %v93 = vpop.permute.xlu0 %92
  %94 = vrot.lane.b32.xlu0 %v60, 18
  %v95 = vpop.permute.xlu0 %94
  %96 = vrot.lane.b32.xlu0 %v62, 18
  %v97 = vpop.permute.xlu0 %96
  %98 = vrot.lane.b32.xlu0 %v64, 18
  %v99 = vpop.permute.xlu0 %98
  %100 = vrot.lane.b32.xlu0 %v66, 18
  %v101 = vpop.permute.xlu0 %100
  %102 = vrot.lane.b32.xlu0 %v68, 18
  %v103 = vpop.permute.xlu0 %102
  %104 = vrot.lane.b32.xlu0 %v70, 18
  %v105 = vpop.permute.xlu0 %104
  %115 = vrot.lane.b32.xlu0 %v74, 36
  %v116 = vpop.permute.xlu0 %115
  %117 = vrot.lane.b32.xlu0 %v76, 36
  %v118 = vpop.permute.xlu0 %117
  %119 = vrot.lane.b32.xlu0 %v78, 36
  %v120 = vpop.permute.xlu0 %119
  %121 = vrot.lane.b32.xlu0 %v80, 36
  %v122 = vpop.permute.xlu0 %121
  %123 = vrot.lane.b32.xlu0 %v82, 36
  %v124 = vpop.permute.xlu0 %123
  %125 = vrot.lane.b32.xlu0 %v84, 36
  %v126 = vpop.permute.xlu0 %125
  %127 = vrot.lane.b32.xlu0 %v86, 36
  %v128 = vpop.permute.xlu0 %127
  %129 = vrot.lane.b32.xlu0 %v88, 36
  %v130 = vpop.permute.xlu0 %129
  %vm139 = vcmask 146432
  %v140 = vsel %vm139, %v37, %v91
  %v141 = vsel %vm139, %v38, %v93
  %v142 = vsel %vm139, %v39, %v95
  %v143 = vsel %vm139, %v40, %v97
  %v144 = vsel %vm139, %v41, %v99
  %v145 = vsel %vm139, %v42, %v101
  %v146 = vsel %vm139, %v43, %v103
  %v147 = vsel %vm139, %v44, %v105
  %vm148 = vcmask 293888
  %v149 = vsel %vm148, %v140, %v116
  %v150 = vsel %vm148, %v141, %v118
  %v151 = vsel %vm148, %v142, %v120
  %v152 = vsel %vm148, %v143, %v122
  %v153 = vsel %vm148, %v144, %v124
  %v154 = vsel %vm148, %v145, %v126
  %v155 = vsel %vm148, %v146, %v128
  %v156 = vsel %vm148, %v147, %v130
  %v157 = vpack.c.bf16 %v150, %v149
  %v158 = vpack.c.bf16 %v152, %v151
  %v159 = vpack.c.bf16 %v154, %v153
  %v160 = vpack.c.bf16 %v156, %v155
  %v161 = vld [vmem:[%s1] sm:$0xf]
  %v162 = vld [vmem:[%s1 + $0x4] sm:$0xf]
  %v163 = vld [vmem:[%s1 + $0x8] sm:$0xf]
  %v164 = vld [vmem:[%s1 + $0xc] sm:$0xf]
  %v165 = vld [vmem:[%s1 + $0x10] sm:$0xf]
  %v166 = vld [vmem:[%s1 + $0x14] sm:$0xf]
  %v167 = vld [vmem:[%s1 + $0x18] sm:$0x7]
  %v168 = vld [vmem:[%s2] sm:$0x1]
  %v170 = vlaneseq
  %v171 = vshrl.u32 %v170, 7
  %v172 = vsub.s32 0, %v171
  %v173 = vrot.slane %v168, %v172
  %v182 = vunpack.c.l.b16 %v161
  %v183 = vunpack.c.l.b16 %v162
  %v184 = vunpack.c.l.b16 %v163
  %v185 = vunpack.c.l.b16 %v164
  %v186 = vunpack.c.l.b16 %v165
  %v187 = vunpack.c.l.b16 %v166
  %v188 = vunpack.c.l.b16 %v167
  %v189 = vpack.c.b16 %v183, %v182
  %v190 = vpack.c.b16 %v185, %v184
  %v191 = vpack.c.b16 %v187, %v186
  %v192 = vpack.c.b16 %v188, %v188
  %vm196 = vcmask 441344
  %v198 = vsel %vm196, %v157, 0
  %v201 = vsel %vm196, %v158, 0
  %v204 = vsel %vm196, %v159, 0
  %v207 = vsel %vm196, %v160, 0
  %vm209 = vcmask 1042432
  %v211 = vsel %vm209, %v192, 0
  %213 = vmatprep.subr.bf16.mxu0 0
  %214 = vmatpush1.bf16.msra.mxu0 %v189
  %215 = vmatprep.subr.bf16.mxu0 0
  %216 = vmatpush1.bf16.msra.mxu0 %v190
  %217 = vmatprep.subr.bf16.mxu0 0
  %218 = vmatpush1.bf16.msra.mxu0 %v191
  %219 = vmatprep.subr.bf16.mxu0 0
  %220 = vmatpush1.bf16.msra.mxu0 %v211
  %221 = vmatprep.subr.bf16.mxu0 0
  %222 = vmatpush1.bf16.msra.mxu0 0
  %223 = vmatprep.subr.bf16.mxu0 0
  %224 = vmatpush1.bf16.msra.mxu0 0
  %225 = vmatprep.subr.bf16.mxu0 0
  %226 = vmatpush1.bf16.msra.mxu0 0
  %227 = vmatprep.subr.bf16.mxu0 0
  %228 = vmatpush1.bf16.msra.mxu0 0
  %229 = vmatprep.subr.bf16.mxu0 0
  %230 = vmatpush1.bf16.msra.mxu0 0
  %231 = vmatprep.subr.bf16.mxu0 0
  %232 = vmatpush1.bf16.msra.mxu0 0
  %233 = vmatprep.subr.bf16.mxu0 0
  %234 = vmatpush1.bf16.msra.mxu0 0
  %235 = vmatprep.subr.bf16.mxu0 0
  %236 = vmatpush1.bf16.msra.mxu0 0
  %237 = vmatprep.subr.bf16.mxu0 0
  %238 = vmatpush1.bf16.msra.mxu0 0
  %239 = vmatprep.subr.bf16.mxu0 0
  %240 = vmatpush1.bf16.msra.mxu0 0
  %241 = vmatprep.subr.bf16.mxu0 0
  %242 = vmatpush1.bf16.msra.mxu0 0
  %243 = vmatprep.subr.bf16.mxu0 0
  %244 = vmatpush1.bf16.msra.mxu0 0
  %245 = vmatprep.mubr.bf16.mxu0 0
  %246 = vmatmul.mubr.bf16.gmra.mrb[0].mxu0 %v198
  %v247 = vpop.f32.mrb[0].mxu0
  %v248 = vadd.f32 %v173, %v247
  %v249 = vpop.f32.mrb[0].mxu0
  %v250 = vpop.f32.mrb[0].mxu0
  %v251 = vadd.f32 %v173, %v250
  %v252 = vpop.f32.mrb[0].mxu0
  %253 = vmatprep.mubr.bf16.mxu0 0
  %254 = vmatmul.mubr.bf16.gmra.mrb[0].mxu0 %v201
  %v255 = vpop.f32.mrb[0].mxu0
  %v256 = vadd.f32 %v173, %v255
  %v257 = vpop.f32.mrb[0].mxu0
  %v258 = vpop.f32.mrb[0].mxu0
  %v259 = vadd.f32 %v173, %v258
  %v260 = vpop.f32.mrb[0].mxu0
  %261 = vmatprep.mubr.bf16.mxu0 0
  %262 = vmatmul.mubr.bf16.gmra.mrb[0].mxu0 %v204
  %v263 = vpop.f32.mrb[0].mxu0
  %v264 = vadd.f32 %v173, %v263
  %v265 = vpop.f32.mrb[0].mxu0
  %v266 = vpop.f32.mrb[0].mxu0
  %v267 = vadd.f32 %v173, %v266
  %v268 = vpop.f32.mrb[0].mxu0
  %269 = vmatprep.mubr.bf16.mxu0 0
  %270 = vmatmul.mubr.bf16.gmra.mrb[0].mxu0 %v207
  %v271 = vpop.f32.mrb[0].mxu0
  %v272 = vadd.f32 %v173, %v271
  %v273 = vpop.f32.mrb[0].mxu0
  %v274 = vpop.f32.mrb[0].mxu0
  %v275 = vadd.f32 %v173, %v274
  %v276 = vpop.f32.mrb[0].mxu0
  %277 = vdwg.mxu0
  %v286 = vrot.slane %v248, 1
  %v287 = vrot.slane %v251, 1
  %v288 = vsel %vm53, %v286, %v287
  %v289 = vrot.slane %v256, 1
  %v290 = vsel %vm53, %v287, %v289
  %v291 = vrot.slane %v259, 1
  %v292 = vsel %vm53, %v289, %v291
  %v293 = vrot.slane %v264, 1
  %v294 = vsel %vm53, %v291, %v293
  %v295 = vrot.slane %v267, 1
  %v296 = vsel %vm53, %v293, %v295
  %v297 = vrot.slane %v272, 1
  %v298 = vsel %vm53, %v295, %v297
  %v299 = vrot.slane %v275, 1
  %v300 = vsel %vm53, %v297, %v299
  %v309 = vsel %vm53, %v299, 0.0
  %v310 = vmax.f32 %v248, %v288
  %v311 = vmax.f32 %v251, %v290
  %v312 = vmax.f32 %v256, %v292
  %v313 = vmax.f32 %v259, %v294
  %v314 = vmax.f32 %v264, %v296
  %v315 = vmax.f32 %v267, %v298
  %v316 = vmax.f32 %v272, %v300
  %v317 = vmax.f32 %v275, %v309
  %v318 = vrot.slane %v248, 2
  %v319 = vrot.slane %v251, 2
  %v320 = vsel %vm71, %v318, %v319
  %v321 = vrot.slane %v256, 2
  %v322 = vsel %vm71, %v319, %v321
  %v323 = vrot.slane %v259, 2
  %v324 = vsel %vm71, %v321, %v323
  %v325 = vrot.slane %v264, 2
  %v326 = vsel %vm71, %v323, %v325
  %v327 = vrot.slane %v267, 2
  %v328 = vsel %vm71, %v325, %v327
  %v329 = vrot.slane %v272, 2
  %v330 = vsel %vm71, %v327, %v329
  %v331 = vrot.slane %v275, 2
  %v332 = vsel %vm71, %v329, %v331
  %v341 = vsel %vm71, %v331, 0.0
  %v342 = vmax.f32 %v310, %v320
  %v343 = vmax.f32 %v311, %v322
  %v344 = vmax.f32 %v312, %v324
  %v345 = vmax.f32 %v313, %v326
  %v346 = vmax.f32 %v314, %v328
  %v347 = vmax.f32 %v315, %v330
  %v348 = vmax.f32 %v316, %v332
  %v349 = vmax.f32 %v317, %v341
  %v358 = vrot.slane %v342, 1
  %v359 = vrot.slane %v343, 1
  %v360 = vsel %vm53, %v358, %v359
  %v361 = vrot.slane %v344, 1
  %v362 = vsel %vm53, %v359, %v361
  %v363 = vrot.slane %v345, 1
  %v364 = vsel %vm53, %v361, %v363
  %v365 = vrot.slane %v346, 1
  %v366 = vsel %vm53, %v363, %v365
  %v367 = vrot.slane %v347, 1
  %v368 = vsel %vm53, %v365, %v367
  %v369 = vrot.slane %v348, 1
  %v370 = vsel %vm53, %v367, %v369
  %v371 = vrot.slane %v349, 1
  %v372 = vsel %vm53, %v369, %v371
  %v381 = vsel %vm53, %v371, 0.0
  %v382 = vrot.slane %v342, 2
  %v383 = vrot.slane %v343, 2
  %v384 = vsel %vm71, %v382, %v383
  %v385 = vrot.slane %v344, 2
  %v386 = vsel %vm71, %v383, %v385
  %v387 = vrot.slane %v345, 2
  %v388 = vsel %vm71, %v385, %v387
  %v389 = vrot.slane %v346, 2
  %v390 = vsel %vm71, %v387, %v389
  %v391 = vrot.slane %v347, 2
  %v392 = vsel %vm71, %v389, %v391
  %v393 = vrot.slane %v348, 2
  %v394 = vsel %vm71, %v391, %v393
  %v395 = vrot.slane %v349, 2
  %v396 = vsel %vm71, %v393, %v395
  %v405 = vsel %vm71, %v395, 0.0
  %v406 = vpack.c.bf16 %v343, %v342
  %v407 = vpack.c.bf16 %v362, %v360
  %v408 = vpack.c.bf16 %v386, %v384
  %v409 = vpack.c.bf16 %v345, %v344
  %v410 = vpack.c.bf16 %v366, %v364
  %v411 = vpack.c.bf16 %v390, %v388
  %v412 = vpack.c.bf16 %v347, %v346
  %v413 = vpack.c.bf16 %v370, %v368
  %v414 = vpack.c.bf16 %v394, %v392
  %v415 = vpack.c.bf16 %v349, %v348
  %v416 = vpack.c.bf16 %v381, %v372
  %v417 = vpack.c.bf16 %v405, %v396
  %v418 = vld [vmem:[%s3] sm:$0xf]
  %v419 = vld [vmem:[%s3 + $0x4] sm:$0xf]
  %v420 = vld [vmem:[%s3 + $0x8] sm:$0xf]
  %v421 = vld [vmem:[%s3 + $0xc] sm:$0xf]
  %v422 = vld [vmem:[%s3 + $0x10] sm:$0xf]
  %v423 = vld [vmem:[%s3 + $0x14] sm:$0xf]
  %v424 = vld [vmem:[%s3 + $0x18] sm:$0xf]
  %v425 = vld [vmem:[%s3 + $0x1c] sm:$0xf]
  %v426 = vld [vmem:[%s3 + $0x20] sm:$0xf]
  %v427 = vld [vmem:[%s3 + $0x24] sm:$0xf]
  %v428 = vld [vmem:[%s3 + $0x28] sm:$0xf]
  %v429 = vld [vmem:[%s3 + $0x2c] sm:$0xf]
  %v430 = vld [vmem:[%s3 + $0x30] sm:$0xf]
  %v431 = vld [vmem:[%s3 + $0x34] sm:$0xf]
  %v432 = vld [vmem:[%s3 + $0x38] sm:$0xf]
  %v433 = vld [vmem:[%s3 + $0x3c] sm:$0xf]
  %v434 = vld [vmem:[%s3 + $0x40] sm:$0xf]
  %v435 = vld [vmem:[%s3 + $0x44] sm:$0xf]
  %v436 = vld [vmem:[%s3 + $0x48] sm:$0xf]
  %v437 = vld [vmem:[%s3 + $0x4c] sm:$0xf]
  %v438 = vld [vmem:[%s3 + $0x50] sm:$0xf]
  %v439 = vld [vmem:[%s3 + $0x54] sm:$0xf]
  %v440 = vld [vmem:[%s3 + $0x58] sm:$0xf]
  %v441 = vld [vmem:[%s3 + $0x5c] sm:$0xf]
  %v442 = vld [vmem:[%s3 + $0x60] sm:$0xf]
  %v443 = vld [vmem:[%s3 + $0x64] sm:$0xf]
  %v444 = vld [vmem:[%s3 + $0x68] sm:$0xf]
  %v445 = vld [vmem:[%s3 + $0x6c] sm:$0xf]
  %v446 = vld [vmem:[%s3 + $0x70] sm:$0xf]
  %v447 = vld [vmem:[%s3 + $0x74] sm:$0xf]
  %v448 = vld [vmem:[%s3 + $0x78] sm:$0xf]
  %v449 = vld [vmem:[%s3 + $0x7c] sm:$0xf]
  %v450 = vld [vmem:[%s3 + $0x80] sm:$0xf]
  %v451 = vld [vmem:[%s3 + $0x84] sm:$0xf]
  %v452 = vld [vmem:[%s3 + $0x88] sm:$0xf]
  %v453 = vld [vmem:[%s3 + $0x8c] sm:$0xf]
  %v454 = vld [vmem:[%s3 + $0x90] sm:$0xf]
  %v455 = vld [vmem:[%s3 + $0x94] sm:$0xf]
  %v456 = vld [vmem:[%s3 + $0x98] sm:$0xf]
  %v457 = vld [vmem:[%s3 + $0x9c] sm:$0xf]
  %v458 = vld [vmem:[%s3 + $0xa0] sm:$0xf]
  %v459 = vld [vmem:[%s3 + $0xa4] sm:$0xf]
  %v460 = vld [vmem:[%s3 + $0xa8] sm:$0xf]
  %v461 = vld [vmem:[%s3 + $0xac] sm:$0xf]
  %v462 = vld [vmem:[%s3 + $0xb0] sm:$0xf]
  %v463 = vld [vmem:[%s3 + $0xb4] sm:$0xf]
  %v464 = vld [vmem:[%s3 + $0xb8] sm:$0xf]
  %v465 = vld [vmem:[%s3 + $0xbc] sm:$0xf]
  %v466 = vld [vmem:[%s4] sm:$0x1]
  %v468 = vlaneseq
  %v469 = vshrl.u32 %v468, 7
  %v470 = vsub.s32 0, %v469
  %v471 = vrot.slane %v466, %v470
  %v521 = vunpack.c.l.b16 %v418
  %v522 = vunpack.c.l.b16 %v419
  %v523 = vunpack.c.l.b16 %v420
  %v524 = vunpack.c.l.b16 %v421
  %v525 = vunpack.c.l.b16 %v422
  %v526 = vunpack.c.l.b16 %v423
  %v527 = vunpack.c.l.b16 %v424
  %v528 = vunpack.c.l.b16 %v425
  %v529 = vunpack.c.l.b16 %v426
  %v530 = vunpack.c.l.b16 %v427
  %v531 = vunpack.c.l.b16 %v428
  %v532 = vunpack.c.l.b16 %v429
  %v533 = vunpack.c.l.b16 %v430
  %v534 = vunpack.c.l.b16 %v431
  %v535 = vunpack.c.l.b16 %v432
  %v536 = vunpack.c.l.b16 %v433
  %v537 = vunpack.c.l.b16 %v434
  %v538 = vunpack.c.l.b16 %v435
  %v539 = vunpack.c.l.b16 %v436
  %v540 = vunpack.c.l.b16 %v437
  %v541 = vunpack.c.l.b16 %v438
  %v542 = vunpack.c.l.b16 %v439
  %v543 = vunpack.c.l.b16 %v440
  %v544 = vunpack.c.l.b16 %v441
  %v545 = vunpack.c.l.b16 %v442
  %v546 = vunpack.c.l.b16 %v443
  %v547 = vunpack.c.l.b16 %v444
  %v548 = vunpack.c.l.b16 %v445
  %v549 = vunpack.c.l.b16 %v446
  %v550 = vunpack.c.l.b16 %v447
  %v551 = vunpack.c.l.b16 %v448
  %v552 = vunpack.c.l.b16 %v449
  %v553 = vunpack.c.l.b16 %v450
  %v554 = vunpack.c.l.b16 %v451
  %v555 = vunpack.c.l.b16 %v452
  %v556 = vunpack.c.l.b16 %v453
  %v557 = vunpack.c.l.b16 %v454
  %v558 = vunpack.c.l.b16 %v455
  %v559 = vunpack.c.l.b16 %v456
  %v560 = vunpack.c.l.b16 %v457
  %v561 = vunpack.c.l.b16 %v458
  %v562 = vunpack.c.l.b16 %v459
  %v563 = vunpack.c.l.b16 %v460
  %v564 = vunpack.c.l.b16 %v461
  %v565 = vunpack.c.l.b16 %v462
  %v566 = vunpack.c.l.b16 %v463
  %v567 = vunpack.c.l.b16 %v464
  %v568 = vunpack.c.l.b16 %v465
  %v569 = vpack.c.b16 %v522, %v521
  %v570 = vpack.c.b16 %v524, %v523
  %v571 = vpack.c.b16 %v526, %v525
  %v572 = vpack.c.b16 %v528, %v527
  %v573 = vpack.c.b16 %v530, %v529
  %v574 = vpack.c.b16 %v532, %v531
  %v575 = vpack.c.b16 %v534, %v533
  %v576 = vpack.c.b16 %v536, %v535
  %v577 = vpack.c.b16 %v538, %v537
  %v578 = vpack.c.b16 %v540, %v539
  %v579 = vpack.c.b16 %v542, %v541
  %v580 = vpack.c.b16 %v544, %v543
  %v581 = vpack.c.b16 %v546, %v545
  %v582 = vpack.c.b16 %v548, %v547
  %v583 = vpack.c.b16 %v550, %v549
  %v584 = vpack.c.b16 %v552, %v551
  %v585 = vpack.c.b16 %v554, %v553
  %v586 = vpack.c.b16 %v556, %v555
  %v587 = vpack.c.b16 %v558, %v557
  %v588 = vpack.c.b16 %v560, %v559
  %v589 = vpack.c.b16 %v562, %v561
  %v590 = vpack.c.b16 %v564, %v563
  %v591 = vpack.c.b16 %v566, %v565
  %v592 = vpack.c.b16 %v568, %v567
  %617 = vmatprep.subr.bf16.mxu0 0
  %618 = vmatpush1.bf16.msra.mxu0 %v569
  %619 = vmatprep.subr.bf16.mxu0 0
  %620 = vmatpush1.bf16.msra.mxu0 %v570
  %621 = vmatprep.subr.bf16.mxu0 0
  %622 = vmatpush1.bf16.msra.mxu0 %v571
  %623 = vmatprep.subr.bf16.mxu0 0
  %624 = vmatpush1.bf16.msra.mxu0 %v572
  %625 = vmatprep.subr.bf16.mxu0 0
  %626 = vmatpush1.bf16.msra.mxu0 %v573
  %627 = vmatprep.subr.bf16.mxu0 0
  %628 = vmatpush1.bf16.msra.mxu0 %v574
  %629 = vmatprep.subr.bf16.mxu0 0
  %630 = vmatpush1.bf16.msra.mxu0 %v575
  %631 = vmatprep.subr.bf16.mxu0 0
  %632 = vmatpush1.bf16.msra.mxu0 %v576
  %633 = vmatprep.subr.bf16.mxu0 0
  %634 = vmatpush1.bf16.msra.mxu0 %v577
  %635 = vmatprep.subr.bf16.mxu0 0
  %636 = vmatpush1.bf16.msra.mxu0 %v578
  %637 = vmatprep.subr.bf16.mxu0 0
  %638 = vmatpush1.bf16.msra.mxu0 %v579
  %639 = vmatprep.subr.bf16.mxu0 0
  %640 = vmatpush1.bf16.msra.mxu0 %v580
  %641 = vmatprep.subr.bf16.mxu0 0
  %642 = vmatpush1.bf16.msra.mxu0 %v581
  %643 = vmatprep.subr.bf16.mxu0 0
  %644 = vmatpush1.bf16.msra.mxu0 %v582
  %645 = vmatprep.subr.bf16.mxu0 0
  %646 = vmatpush1.bf16.msra.mxu0 %v583
  %647 = vmatprep.subr.bf16.mxu0 0
  %648 = vmatpush1.bf16.msra.mxu0 %v584
  %649 = vmatprep.mubr.bf16.mxu0 %v407
  %650 = vmatmul.mubr.bf16.gmra.mrb[0].mxu0 %v406
  %v651 = vpop.f32.mrb[0].mxu0
  %v652 = vadd.f32 %v471, %v651
  %v653 = vpop.f32.mrb[0].mxu0
  %v654 = vpop.f32.mrb[0].mxu0
  %v655 = vadd.f32 %v471, %v654
  %v656 = vpop.f32.mrb[0].mxu0
  %657 = vmatprep.mubr.bf16.mxu0 %v410
  %658 = vmatmul.mubr.bf16.gmra.mrb[0].mxu0 %v409
  %v659 = vpop.f32.mrb[0].mxu0
  %v660 = vadd.f32 %v471, %v659
  %v661 = vpop.f32.mrb[0].mxu0
  %v662 = vpop.f32.mrb[0].mxu0
  %v663 = vadd.f32 %v471, %v662
  %v664 = vpop.f32.mrb[0].mxu0
  %665 = vmatprep.mubr.bf16.mxu0 %v413
  %666 = vmatmul.mubr.bf16.gmra.mrb[0].mxu0 %v412
  %v667 = vpop.f32.mrb[0].mxu0
  %v668 = vadd.f32 %v471, %v667
  %v669 = vpop.f32.mrb[0].mxu0
  %v670 = vpop.f32.mrb[0].mxu0
  %v671 = vadd.f32 %v471, %v670
  %v672 = vpop.f32.mrb[0].mxu0
  %673 = vmatprep.mubr.bf16.mxu0 %v416
  %674 = vmatmul.mubr.bf16.gmra.mrb[0].mxu0 %v415
  %v675 = vpop.f32.mrb[0].mxu0
  %v676 = vadd.f32 %v471, %v675
  %v677 = vpop.f32.mrb[0].mxu0
  %v678 = vpop.f32.mrb[0].mxu0
  %v679 = vadd.f32 %v471, %v678
  %v680 = vpop.f32.mrb[0].mxu0
  %681 = vdwg.mxu0
  %682 = vmatprep.subr.bf16.mxu0 0
  %683 = vmatpush1.bf16.msra.mxu0 %v585
  %684 = vmatprep.subr.bf16.mxu0 0
  %685 = vmatpush1.bf16.msra.mxu0 %v586
  %686 = vmatprep.subr.bf16.mxu0 0
  %687 = vmatpush1.bf16.msra.mxu0 %v587
  %688 = vmatprep.subr.bf16.mxu0 0
  %689 = vmatpush1.bf16.msra.mxu0 %v588
  %690 = vmatprep.subr.bf16.mxu0 0
  %691 = vmatpush1.bf16.msra.mxu0 %v589
  %692 = vmatprep.subr.bf16.mxu0 0
  %693 = vmatpush1.bf16.msra.mxu0 %v590
  %694 = vmatprep.subr.bf16.mxu0 0
  %695 = vmatpush1.bf16.msra.mxu0 %v591
  %696 = vmatprep.subr.bf16.mxu0 0
  %697 = vmatpush1.bf16.msra.mxu0 %v592
  %698 = vmatprep.subr.bf16.mxu0 0
  %699 = vmatpush1.bf16.msra.mxu0 0
  %700 = vmatprep.subr.bf16.mxu0 0
  %701 = vmatpush1.bf16.msra.mxu0 0
  %702 = vmatprep.subr.bf16.mxu0 0
  %703 = vmatpush1.bf16.msra.mxu0 0
  %704 = vmatprep.subr.bf16.mxu0 0
  %705 = vmatpush1.bf16.msra.mxu0 0
  %706 = vmatprep.subr.bf16.mxu0 0
  %707 = vmatpush1.bf16.msra.mxu0 0
  %708 = vmatprep.subr.bf16.mxu0 0
  %709 = vmatpush1.bf16.msra.mxu0 0
  %710 = vmatprep.subr.bf16.mxu0 0
  %711 = vmatpush1.bf16.msra.mxu0 0
  %712 = vmatprep.subr.bf16.mxu0 0
  %713 = vmatpush1.bf16.msra.mxu0 0
  %714 = vmatprep.mubr.bf16.mxu0 0
  %715 = vmatmul.mubr.bf16.gmra.mrb[0].mxu0 %v408
  %v716 = vpop.f32.mrb[0].mxu0
  %v717 = vadd.f32 %v652, %v716
  %v718 = vpop.f32.mrb[0].mxu0
  %v719 = vpop.f32.mrb[0].mxu0
  %v720 = vadd.f32 %v655, %v719
  %v721 = vpop.f32.mrb[0].mxu0
  %722 = vmatprep.mubr.bf16.mxu0 0
  %723 = vmatmul.mubr.bf16.gmra.mrb[0].mxu0 %v411
  %v724 = vpop.f32.mrb[0].mxu0
  %v725 = vadd.f32 %v660, %v724
  %v726 = vpop.f32.mrb[0].mxu0
  %v727 = vpop.f32.mrb[0].mxu0
  %v728 = vadd.f32 %v663, %v727
  %v729 = vpop.f32.mrb[0].mxu0
  %730 = vmatprep.mubr.bf16.mxu0 0
  %731 = vmatmul.mubr.bf16.gmra.mrb[0].mxu0 %v414
  %v732 = vpop.f32.mrb[0].mxu0
  %v733 = vadd.f32 %v668, %v732
  %v734 = vpop.f32.mrb[0].mxu0
  %v735 = vpop.f32.mrb[0].mxu0
  %v736 = vadd.f32 %v671, %v735
  %v737 = vpop.f32.mrb[0].mxu0
  %738 = vmatprep.mubr.bf16.mxu0 0
  %739 = vmatmul.mubr.bf16.gmra.mrb[0].mxu0 %v417
  %v740 = vpop.f32.mrb[0].mxu0
  %v741 = vadd.f32 %v676, %v740
  %v742 = vpop.f32.mrb[0].mxu0
  %v743 = vpop.f32.mrb[0].mxu0
  %v744 = vadd.f32 %v679, %v743
  %v745 = vpop.f32.mrb[0].mxu0
  %746 = vdwg.mxu0
  %v755 = vrot.slane %v717, 1
  %v756 = vrot.slane %v720, 1
  %v757 = vsel %vm53, %v755, %v756
  %v758 = vrot.slane %v725, 1
  %v759 = vsel %vm53, %v756, %v758
  %v760 = vrot.slane %v728, 1
  %v761 = vsel %vm53, %v758, %v760
  %v762 = vrot.slane %v733, 1
  %v763 = vsel %vm53, %v760, %v762
  %v764 = vrot.slane %v736, 1
  %v765 = vsel %vm53, %v762, %v764
  %v766 = vrot.slane %v741, 1
  %v767 = vsel %vm53, %v764, %v766
  %v768 = vrot.slane %v744, 1
  %v769 = vsel %vm53, %v766, %v768
  %v778 = vsel %vm53, %v768, 0.0
  %v779 = vmax.f32 %v717, %v757
  %v780 = vmax.f32 %v720, %v759
  %v781 = vmax.f32 %v725, %v761
  %v782 = vmax.f32 %v728, %v763
  %v783 = vmax.f32 %v733, %v765
  %v784 = vmax.f32 %v736, %v767
  %v785 = vmax.f32 %v741, %v769
  %v786 = vmax.f32 %v744, %v778
  %v787 = vrot.slane %v717, 2
  %v788 = vrot.slane %v720, 2
  %v789 = vsel %vm71, %v787, %v788
  %v790 = vrot.slane %v725, 2
  %v791 = vsel %vm71, %v788, %v790
  %v792 = vrot.slane %v728, 2
  %v793 = vsel %vm71, %v790, %v792
  %v794 = vrot.slane %v733, 2
  %v795 = vsel %vm71, %v792, %v794
  %v796 = vrot.slane %v736, 2
  %v797 = vsel %vm71, %v794, %v796
  %v798 = vrot.slane %v741, 2
  %v799 = vsel %vm71, %v796, %v798
  %v800 = vrot.slane %v744, 2
  %v801 = vsel %vm71, %v798, %v800
  %v810 = vsel %vm71, %v800, 0.0
  %v811 = vmax.f32 %v779, %v789
  %v812 = vmax.f32 %v780, %v791
  %v813 = vmax.f32 %v781, %v793
  %v814 = vmax.f32 %v782, %v795
  %v815 = vmax.f32 %v783, %v797
  %v816 = vmax.f32 %v784, %v799
  %v817 = vmax.f32 %v785, %v801
  %v818 = vmax.f32 %v786, %v810
  %v819 = vld [vmem:[%s5] sm:$0x3]
  %v820 = vld [vmem:[#allocation2] sm:$0x1]
  %v822 = vlaneseq
  %v823 = vshrl.u32 %v822, 7
  %v824 = vsub.s32 0, %v823
  %v825 = vrot.slane %v820, %v824
  %826 = vset.pattern.permute.xlu0 0
  %827 = vperm.xlu0 %826, %v825
  %v828 = vpop.permute.xlu0 %827
  %vm830 = vcmask 523264
  %v832 = vsel %vm830, %v819, 0
  %834 = vmatprep.subr.mxu0 0.0
  %835 = vmatpush1.msra.mxu0 %v811
  %836 = vmatprep.subr.mxu0 0.0
  %837 = vmatpush1.msra.mxu0 %v812
  %838 = vmatprep.subr.mxu0 0.0
  %839 = vmatpush1.msra.mxu0 %v813
  %840 = vmatprep.subr.mxu0 0.0
  %841 = vmatpush1.msra.mxu0 %v814
  %842 = vmatprep.subr.mxu0 0.0
  %843 = vmatpush1.msra.mxu0 %v815
  %844 = vmatprep.subr.mxu0 0.0
  %845 = vmatpush1.msra.mxu0 %v816
  %846 = vmatprep.subr.mxu0 0.0
  %847 = vmatpush1.msra.mxu0 %v817
  %848 = vmatprep.subr.mxu0 0.0
  %849 = vmatpush1.msra.mxu0 %v818
  %850 = vmatprep.subr.mxu0 0.0
  %851 = vmatpush1.msra.mxu0 0.0
  %852 = vmatprep.subr.mxu0 0.0
  %853 = vmatpush1.msra.mxu0 0.0
  %854 = vmatprep.subr.mxu0 0.0
  %855 = vmatpush1.msra.mxu0 0.0
  %856 = vmatprep.subr.mxu0 0.0
  %857 = vmatpush1.msra.mxu0 0.0
  %858 = vmatprep.subr.mxu0 0.0
  %859 = vmatpush1.msra.mxu0 0.0
  %860 = vmatprep.subr.mxu0 0.0
  %861 = vmatpush1.msra.mxu0 0.0
  %862 = vmatprep.subr.mxu0 0.0
  %863 = vmatpush1.msra.mxu0 0.0
  %864 = vmatprep.subr.mxu0 0.0
  %865 = vmatpush1.msra.mxu0 0.0
  %866 = vmatprep.subr.mxu0 0.0
  %867 = vmatpush1.msra.mxu0 0.0
  %868 = vmatprep.subr.mxu0 0.0
  %869 = vmatpush1.msra.mxu0 0.0
  %870 = vmatprep.subr.mxu0 0.0
  %871 = vmatpush1.msra.mxu0 0.0
  %872 = vmatprep.subr.mxu0 0.0
  %873 = vmatpush1.msra.mxu0 0.0
  %874 = vmatprep.subr.mxu0 0.0
  %875 = vmatpush1.msra.mxu0 0.0
  %876 = vmatprep.subr.mxu0 0.0
  %877 = vmatpush1.msra.mxu0 0.0
  %878 = vmatprep.subr.mxu0 0.0
  %879 = vmatpush1.msra.mxu0 0.0
  %880 = vmatprep.subr.mxu0 0.0
  %881 = vmatpush1.msra.mxu0 0.0
  %882 = vmatprep.subr.mxu0 0.0
  %883 = vmatpush1.msra.mxu0 0.0
  %884 = vmatprep.subr.mxu0 0.0
  %885 = vmatpush1.msra.mxu0 0.0
  %886 = vmatprep.subr.mxu0 0.0
  %887 = vmatpush1.msra.mxu0 0.0
  %888 = vmatprep.subr.mxu0 0.0
  %889 = vmatpush1.msra.mxu0 0.0
  %890 = vmatprep.subr.mxu0 0.0
  %891 = vmatpush1.msra.mxu0 0.0
  %892 = vmatprep.subr.mxu0 0.0
  %893 = vmatpush1.msra.mxu0 0.0
  %894 = vmatprep.subr.mxu0 0.0
  %895 = vmatpush1.msra.mxu0 0.0
  %896 = vmatprep.subr.mxu0 0.0
  %897 = vmatpush1.msra.mxu0 0.0
  %898 = vmatprep.mubr.f32.mxu0 0.0
  %899 = vmatmul.mubr.f32.gmra.mrb[0].mxu0 %v832
  %v900 = vpop.f32.mrb[0].mxu0
  %v901 = vadd.f32 %v828, %v900
  %v902 = vpop.f32.mrb[0].mxu0
  %903 = vdwg.mxu0
  %v904 = vtanh.pop %v901
  %v905 = vld [vmem:[%s7] sm:$0xff]
  %v906 = vld [vmem:[%s7 + $0x8] sm:$0xff]
  %v907 = vld [vmem:[%s7 + $0x10] sm:$0xff]
  %v908 = vld [vmem:[%s7 + $0x18] sm:$0xff]
  %v909 = vld [vmem:[%s7 + $0x20] sm:$0xff]
  %v910 = vld [vmem:[%s7 + $0x28] sm:$0xff]
  %v911 = vld [vmem:[%s7 + $0x30] sm:$0xff]
  %v912 = vld [vmem:[%s7 + $0x38] sm:$0xff]
  %v913 = vld [vmem:[#allocation3] sm:$0x1]
  %v915 = vlaneseq
  %v916 = vshrl.u32 %v915, 7
  %v917 = vsub.s32 0, %v916
  %v918 = vrot.slane %v913, %v917
  %v921 = vsel %vm830, %v904, 0
  %923 = vmatprep.subr.mxu0 0.0
  %924 = vmatpush1.msra.mxu0 %v905
  %925 = vmatprep.subr.mxu0 0.0
  %926 = vmatpush1.msra.mxu0 %v906
  %927 = vmatprep.subr.mxu0 0.0
  %928 = vmatpush1.msra.mxu0 %v907
  %929 = vmatprep.subr.mxu0 0.0
  %930 = vmatpush1.msra.mxu0 %v908
  %931 = vmatprep.subr.mxu0 0.0
  %932 = vmatpush1.msra.mxu0 %v909
  %933 = vmatprep.subr.mxu0 0.0
  %934 = vmatpush1.msra.mxu0 %v910
  %935 = vmatprep.subr.mxu0 0.0
  %936 = vmatpush1.msra.mxu0 %v911
  %937 = vmatprep.subr.mxu0 0.0
  %938 = vmatpush1.msra.mxu0 %v912
  %939 = vmatprep.subr.mxu0 0.0
  %940 = vmatpush1.msra.mxu0 0.0
  %941 = vmatprep.subr.mxu0 0.0
  %942 = vmatpush1.msra.mxu0 0.0
  %943 = vmatprep.subr.mxu0 0.0
  %944 = vmatpush1.msra.mxu0 0.0
  %945 = vmatprep.subr.mxu0 0.0
  %946 = vmatpush1.msra.mxu0 0.0
  %947 = vmatprep.subr.mxu0 0.0
  %948 = vmatpush1.msra.mxu0 0.0
  %949 = vmatprep.subr.mxu0 0.0
  %950 = vmatpush1.msra.mxu0 0.0
  %951 = vmatprep.subr.mxu0 0.0
  %952 = vmatpush1.msra.mxu0 0.0
  %953 = vmatprep.subr.mxu0 0.0
  %954 = vmatpush1.msra.mxu0 0.0
  %955 = vmatprep.subr.mxu0 0.0
  %956 = vmatpush1.msra.mxu0 0.0
  %957 = vmatprep.subr.mxu0 0.0
  %958 = vmatpush1.msra.mxu0 0.0
  %959 = vmatprep.subr.mxu0 0.0
  %960 = vmatpush1.msra.mxu0 0.0
  %961 = vmatprep.subr.mxu0 0.0
  %962 = vmatpush1.msra.mxu0 0.0
  %963 = vmatprep.subr.mxu0 0.0
  %964 = vmatpush1.msra.mxu0 0.0
  %965 = vmatprep.subr.mxu0 0.0
  %966 = vmatpush1.msra.mxu0 0.0
  %967 = vmatprep.subr.mxu0 0.0
  %968 = vmatpush1.msra.mxu0 0.0
  %969 = vmatprep.subr.mxu0 0.0
  %970 = vmatpush1.msra.mxu0 0.0
  %971 = vmatprep.subr.mxu0 0.0
  %972 = vmatpush1.msra.mxu0 0.0
  %973 = vmatprep.subr.mxu0 0.0
  %974 = vmatpush1.msra.mxu0 0.0
  %975 = vmatprep.subr.mxu0 0.0
  %976 = vmatpush1.msra.mxu0 0.0
  %977 = vmatprep.subr.mxu0 0.0
  %978 = vmatpush1.msra.mxu0 0.0
  %979 = vmatprep.subr.mxu0 0.0
  %980 = vmatpush1.msra.mxu0 0.0
  %981 = vmatprep.subr.mxu0 0.0
  %982 = vmatpush1.msra.mxu0 0.0
  %983 = vmatprep.subr.mxu0 0.0
  %984 = vmatpush1.msra.mxu0 0.0
  %985 = vmatprep.subr.mxu0 0.0
  %986 = vmatpush1.msra.mxu0 0.0
  %987 = vmatprep.mubr.f32.mxu0 0.0
  %988 = vmatmul.mubr.f32.gmra.mrb[0].mxu0 %v921
  %v989 = vpop.f32.mrb[0].mxu0
  %v990 = vadd.f32 %v918, %v989
  %v991 = vpop.f32.mrb[0].mxu0
  %992 = vdwg.mxu0
  %v993 = vtanh.pop %v990
  %vm994 = vcmask 1024
  %995 = vst.msk [vmem:[%s9] sm:$0x3] %vm994, %v993
  // Predicated region
  $region38: #{cnn_forward.1} parent=0 // pred_check
    _
  $region39: #{cnn_forward.1} parent=0 // pred_check_branch
    %997 = sbr.rel (0) target = $region41
  $region40: #{cnn_forward.1} parent=0 // pred_region
    _
  $region41: #{cnn_forward.1} parent=0 // pred_fallthru
    _
  // Predicated region
  $region42: #{cnn_forward.1} parent=0 // pred_check
    _
  $region43: #{cnn_forward.1} parent=0 // pred_check_branch
    %999 = sbr.rel (0) target = $region45
  $region44: #{cnn_forward.1} parent=0 // pred_region
    _
  $region45: #{cnn_forward.1} parent=0 // pred_fallthru
    _

</llo_original>
